<compile_context>
chip_gen: v7x
topology: tpu7x:2x2x1
jax: 0.10.0
libtpu: 0.0.40
codegen_flags: <defaults>
</compile_context>

<pallas_src>
import functools

import jax
import jax.numpy as jnp
from jax import lax
from jax.experimental import pallas as pl
from jax.experimental.pallas import tpu as pltpu


def _round_up(a, b):
    return (a + b - 1) // b * b


def _embed_kernel(w_ref, tc_ref, pool_ref, out_ref, *, cout_conv):
    # w_ref:    (Cout_pad, Ck3_pad)          bf16 conv weight (zero padded)
    # tc_ref:   (Ck3_pad, TILE_L)            bf16 conv patches for this lane tile
    # pool_ref: (Cin, TILE_L)                f32 max-pool result for this lane tile
    # out_ref:  (Cout_conv + Cin, TILE_L)    fused output: conv rows then pool rows
    acc = jnp.dot(w_ref[...], tc_ref[...], preferred_element_type=jnp.float32)
    out_ref[0:cout_conv, :] = acc[0:cout_conv, :].astype(out_ref.dtype)
    out_ref[cout_conv:, :] = pool_ref[...].astype(out_ref.dtype)


def _pick_tile_l(l_pad, ck3_pad):
    # Largest lane tile (multiple of 128) that divides l_pad while keeping the
    # bf16 patch tile <= 2 MiB, so double-buffered inputs stay far below the
    # scoped VMEM limit on every generation (incl. v7x's 64 MiB physical VMEM).
    for t in (4096, 2048, 1024, 512, 256, 128):
        if l_pad % t == 0 and ck3_pad * t * 2 <= (2 << 20):
            return t
    return 128


@jax.jit
def input_embedding(x, w):
    """x: (N, Cin, D, H, W) float32; w: (Cout_conv, Cin, 5, 5, 5) float32."""
    N, Cin, D, H, W = x.shape
    Cout_conv = w.shape[0]
    K, dil, stride, pc, pp = 5, 3, 2, 6, 2
    k3 = K ** 3

    # Output spatial sizes (PyTorch formulas); conv and pool must agree for cat.
    Do = (D + 2 * pc - dil * (K - 1) - 1) // stride + 1
    Ho = (H + 2 * pc - dil * (K - 1) - 1) // stride + 1
    Wo = (W + 2 * pc - dil * (K - 1) - 1) // stride + 1
    Dp = (D + 2 * pp - K) // stride + 1
    Hp = (H + 2 * pp - K) // stride + 1
    Wp = (W + 2 * pp - K) // stride + 1
    assert (Do, Ho, Wo) == (Dp, Hp, Wp)
    P = Do * Ho * Wo
    L = N * P                      # batch folded into the lane axis

    # ---- glue: conv im2col (batch folded into lanes) ----
    xc = jnp.pad(x, ((0, 0), (0, 0), (pc, pc), (pc, pc), (pc, pc)))
    taps = []
    for kd in range(K):
        for kh in range(K):
            for kw in range(K):
                taps.append(
                    xc[:, :,
                       kd * dil: kd * dil + stride * Do: stride,
                       kh * dil: kh * dil + stride * Ho: stride,
                       kw * dil: kw * dil + stride * Wo: stride])
    # (N, Cin, K3, Do, Ho, Wo) -> (Cin*K3, N*P); row order (ci, kd, kh, kw)
    # matches w.reshape(Cout_conv, Cin*K3); lane order is n*P + p.
    tc = jnp.stack(taps, axis=2).transpose(1, 2, 0, 3, 4, 5).reshape(Cin * k3, L)

    # ---- glue: max-pool as a running maximum (no 125x im2col expansion) ----
    xp = jnp.pad(x, ((0, 0), (0, 0), (pp, pp), (pp, pp), (pp, pp)),
                 constant_values=-jnp.inf)
    pool = None
    for kd in range(K):
        for kh in range(K):
            for kw in range(K):
                tap = xp[:, :,
                         kd: kd + stride * Do: stride,
                         kh: kh + stride * Ho: stride,
                         kw: kw + stride * Wo: stride]
                pool = tap if pool is None else jnp.maximum(pool, tap)
    pool2d = pool.transpose(1, 0, 2, 3, 4).reshape(Cin, L)   # (Cin, N*P), finite

    # ---- pad to MXU / lane-friendly sizes ----
    Ck3 = Cin * k3
    Ck3_pad = _round_up(Ck3, 128)          # contraction dim: 125 -> 128
    Cout_pad = _round_up(Cout_conv, 8)     # matmul rows:      15 -> 16
    L_pad = _round_up(L, 128)              # lane-dense output stores

    wm = (jnp.zeros((Cout_pad, Ck3_pad), jnp.float32)
          .at[:Cout_conv, :Ck3].set(w.reshape(Cout_conv, Ck3))
          .astype(jnp.bfloat16))
    tc = jnp.pad(tc, ((0, Ck3_pad - Ck3), (0, L_pad - L))).astype(jnp.bfloat16)
    pool2d = jnp.pad(pool2d, ((0, 0), (0, L_pad - L)))

    out_chs = Cout_conv + Cin
    TILE_L = _pick_tile_l(L_pad, Ck3_pad)
    grid = (L_pad // TILE_L,)

    kernel = functools.partial(_embed_kernel, cout_conv=Cout_conv)
    out2d = pl.pallas_call(
        kernel,
        out_shape=jax.ShapeDtypeStruct((out_chs, L_pad), x.dtype),
        grid=grid,
        in_specs=[
            pl.BlockSpec((Cout_pad, Ck3_pad), lambda l: (0, 0)),   # weight, resident
            pl.BlockSpec((Ck3_pad, TILE_L), lambda l: (0, l)),     # conv patches
            pl.BlockSpec((Cin, TILE_L), lambda l: (0, l)),         # pooled rows
        ],
        out_specs=pl.BlockSpec((out_chs, TILE_L), lambda l: (0, l)),
        compiler_params=pltpu.CompilerParams(
            dimension_semantics=("parallel",),
            vmem_limit_bytes=32 * 1024 * 1024),
    )(wm, tc, pool2d)

    # (out_chs, N*P) -> (N, out_chs, Do, Ho, Wo)
    out = out2d[:, :L].reshape(out_chs, N, Do, Ho, Wo).transpose(1, 0, 2, 3, 4)
    return out


if __name__ == "__main__":
    key = jax.random.PRNGKey(0)
    kw_key, kx_key = jax.random.split(key)

    in_chs, out_chs = 1, 16
    N, D, H, W = 2, 8, 8, 8
    cout_conv = out_chs - in_chs

    # Conv3d weight: (out_chs - in_chs, in_chs, 5, 5, 5), no bias.
    w = 0.1 * jax.random.normal(kw_key, (cout_conv, in_chs, 5, 5, 5), jnp.float32)
    x = jax.random.normal(kx_key, (N, in_chs, D, H, W), jnp.float32)

    out = input_embedding(x, w)
    out = jax.block_until_ready(out)

    # Reference check against XLA's conv / reduce_window.
    ref_conv = lax.conv_general_dilated(
        x, w, window_strides=(2, 2, 2), padding=[(6, 6)] * 3,
        rhs_dilation=(3, 3, 3),
        dimension_numbers=("NCDHW", "OIDHW", "NCDHW"))
    ref_pool = lax.reduce_window(
        x, -jnp.inf, lax.max,
        window_dimensions=(1, 1, 5, 5, 5),
        window_strides=(1, 1, 2, 2, 2),
        padding=[(0, 0), (0, 0), (2, 2), (2, 2), (2, 2)])

    assert out.shape == (N, out_chs, 4, 4, 4), out.shape
    # conv runs in bf16 with f32 accumulation -> loosened tolerance;
    # pool path is exact f32.
    assert jnp.allclose(out[:, :cout_conv], ref_conv, atol=5e-2, rtol=5e-2)
    assert jnp.allclose(out[:, cout_conv:], ref_pool, atol=1e-5, rtol=1e-5)
    print("KERNEL_OK")
</pallas_src>

<mosaic_0001>
module attributes {stable_mosaic.version = 11 : i64} {
  func.func @_embed_kernel(%arg0: i32, %arg1: memref<16x128xbf16, #tpu.memory_space<vmem>>, %arg2: memref<128x128xbf16, #tpu.memory_space<vmem>>, %arg3: memref<1x128xf32, #tpu.memory_space<vmem>>, %arg4: memref<16x128xf32, #tpu.memory_space<vmem>>) attributes {dimension_semantics = [#tpu.dimension_semantics<parallel>], iteration_bounds = array<i64: 1>, scalar_prefetch = 0 : i64, scratch_operands = 0 : i64, tpu.core_type = #tpu.core_type<tc>, window_params = [{pipeline_mode = #tpu.pipeline_mode<synchronous>, transform_indices = @transform_0, window_bounds = array<i64: 16, 128>}, {transform_indices = @transform_1, window_bounds = array<i64: 128, 128>}, {transform_indices = @transform_2, window_bounds = array<i64: 1, 128>}, {transform_indices = @transform_3, window_bounds = array<i64: 16, 128>}]} {
    %c0 = arith.constant 0 : index
    %c0_0 = arith.constant 0 : index
    %0 = vector.load %arg1[%c0, %c0_0] : memref<16x128xbf16, #tpu.memory_space<vmem>>, vector<16x128xbf16>
    %c0_1 = arith.constant 0 : index
    %c0_2 = arith.constant 0 : index
    %1 = vector.load %arg2[%c0_1, %c0_2] : memref<128x128xbf16, #tpu.memory_space<vmem>>, vector<128x128xbf16>
    %cst = arith.constant dense<0.000000e+00> : vector<16x128xf32>
    %2 = tpu.matmul %0, %1, %cst {dimension_numbers = #tpu.dot_dimension_numbers<[1], [0], [0], [1], [0, 0, 1, 1], [], []>} : vector<16x128xbf16>, vector<128x128xbf16>, vector<16x128xf32> -> vector<16x128xf32>
    %3 = vector.extract_strided_slice %2 {offsets = [0, 0], sizes = [15, 128], strides = [1, 1]} : vector<16x128xf32> to vector<15x128xf32>
    %c0_3 = arith.constant 0 : index
    %c0_4 = arith.constant 0 : index
    %4 = vector.load %arg4[%c0_3, %c0_4] : memref<16x128xf32, #tpu.memory_space<vmem>>, vector<15x128xf32>
    tpu.vector_store %arg4[%c0_3, %c0_4], %3 {strides = array<i32>} : memref<16x128xf32, #tpu.memory_space<vmem>>, vector<15x128xf32>,
    %c0_5 = arith.constant 0 : index
    %c0_6 = arith.constant 0 : index
    %5 = vector.load %arg3[%c0_5, %c0_6] : memref<1x128xf32, #tpu.memory_space<vmem>>, vector<1x128xf32>
    %c15 = arith.constant 15 : index
    %c0_7 = arith.constant 0 : index
    %6 = vector.load %arg4[%c15, %c0_7] : memref<16x128xf32, #tpu.memory_space<vmem>>, vector<1x128xf32>
    tpu.vector_store %arg4[%c15, %c0_7], %5 {strides = array<i32>} : memref<16x128xf32, #tpu.memory_space<vmem>>, vector<1x128xf32>,
    return
  }
  func.func @transform_0(%arg0: i32) -> (i32, i32) {
    %c0_i32 = arith.constant 0 : i32
    %c0_i32_0 = arith.constant 0 : i32
    %c0_i32_1 = arith.constant 0 : i32
    return %c0_i32, %c0_i32_0 : i32, i32
  }
  func.func @transform_1(%arg0: i32) -> (i32, i32) {
    %c0_i32 = arith.constant 0 : i32
    %c0_i32_0 = arith.constant 0 : i32
    return %c0_i32, %arg0 : i32, i32
  }
  func.func @transform_2(%arg0: i32) -> (i32, i32) {
    %c0_i32 = arith.constant 0 : i32
    %c0_i32_0 = arith.constant 0 : i32
    return %c0_i32, %arg0 : i32, i32
  }
  func.func @transform_3(%arg0: i32) -> (i32, i32) {
    %c0_i32 = arith.constant 0 : i32
    %c0_i32_0 = arith.constant 0 : i32
    return %c0_i32, %arg0 : i32, i32
  }
}

</mosaic_0001>

<llo_original>
// kernel: input_embedding.1
$region0: #{input_embedding.1}
  #allocation0 [shape = 'u32[]', space=smem, size = 0x4, offset = 0x4, fixed_abs, tag = 'smem constant byte address 0x4 - core index']
  #allocation1 [shape = 'u32[144,128]{1,0:T(1,128)}', space=vmem, size = 0x12000, scoped, tag = 'internal scratch']
  %s0 = inlined_call_operand.vmem [shape: bf16[16,128], index: 0, kind: input, shape index: {}]
  %s1 = inlined_call_operand.vmem [shape: bf16[128,128], index: 1, kind: input, shape index: {}]
  %s2 = inlined_call_operand.vmem [shape: f32[1,128], index: 2, kind: input, shape index: {}]
  %s3 = inlined_call_operand.vmem [shape: f32[16,128], index: 3, kind: output, shape index: {}]
  %s4 = sld [smem:[#allocation0]]
  $region22: #{input_embedding.1} parent=0
    _
  %s6 = ssub.s32 1, %s4
  %s7 = scalar_select 0, %s6, %s4
  // Predicated region
  $region2: #{input_embedding.1} parent=0 // pred_check
    _
  $region3: #{input_embedding.1} parent=0 // pred_check_branch
    %9 = sbr.rel (0) target = $region5
  $region4: #{input_embedding.1} parent=0 // pred_region
    _
  $region5: #{input_embedding.1} parent=0 // pred_fallthru
    _
  // Predicated region
  $region6: #{input_embedding.1} parent=0 // pred_check
    _
  $region7: #{input_embedding.1} parent=0 // pred_check_branch
    %11 = sbr.rel (0) target = $region9
  $region8: #{input_embedding.1} parent=0 // pred_region
    _
  $region9: #{input_embedding.1} parent=0 // pred_fallthru
    _
  // Predicated region
  $region10: #{input_embedding.1} parent=0 // pred_check
    _
  $region11: #{input_embedding.1} parent=0 // pred_check_branch
    %13 = sbr.rel (0) target = $region13
  $region12: #{input_embedding.1} parent=0 // pred_region
    _
  $region13: #{input_embedding.1} parent=0 // pred_fallthru
    _
  %v15 = vld [vmem:[%s0] sm:$0xf]
  %v16 = vld [vmem:[%s0 + $0x4] sm:$0xf]
  %v17 = vld [vmem:[%s1] sm:$0xf]
  %v18 = vld [vmem:[%s1 + $0x4] sm:$0xf]
  %v19 = vld [vmem:[%s1 + $0x8] sm:$0xf]
  %v20 = vld [vmem:[%s1 + $0xc] sm:$0xf]
  %v21 = vld [vmem:[%s1 + $0x10] sm:$0xf]
  %v22 = vld [vmem:[%s1 + $0x14] sm:$0xf]
  %v23 = vld [vmem:[%s1 + $0x18] sm:$0xf]
  %v24 = vld [vmem:[%s1 + $0x1c] sm:$0xf]
  %v25 = vld [vmem:[%s1 + $0x20] sm:$0xf]
  %v26 = vld [vmem:[%s1 + $0x24] sm:$0xf]
  %v27 = vld [vmem:[%s1 + $0x28] sm:$0xf]
  %v28 = vld [vmem:[%s1 + $0x2c] sm:$0xf]
  %v29 = vld [vmem:[%s1 + $0x30] sm:$0xf]
  %v30 = vld [vmem:[%s1 + $0x34] sm:$0xf]
  %v31 = vld [vmem:[%s1 + $0x38] sm:$0xf]
  %v32 = vld [vmem:[%s1 + $0x3c] sm:$0xf]
  %v35 = vunpack.c.l.b16 %v15
  %v36 = vunpack.c.l.b16 %v16
  %v37 = vpack.c.b16 %v36, %v35
  %v55 = vunpack.c.l.b16 %v17
  %v56 = vunpack.c.l.b16 %v18
  %v57 = vunpack.c.l.b16 %v19
  %v58 = vunpack.c.l.b16 %v20
  %v59 = vunpack.c.l.b16 %v21
  %v60 = vunpack.c.l.b16 %v22
  %v61 = vunpack.c.l.b16 %v23
  %v62 = vunpack.c.l.b16 %v24
  %v63 = vunpack.c.l.b16 %v25
  %v64 = vunpack.c.l.b16 %v26
  %v65 = vunpack.c.l.b16 %v27
  %v66 = vunpack.c.l.b16 %v28
  %v67 = vunpack.c.l.b16 %v29
  %v68 = vunpack.c.l.b16 %v30
  %v69 = vunpack.c.l.b16 %v31
  %v70 = vunpack.c.l.b16 %v32
  %v71 = vpack.c.b16 %v56, %v55
  %v72 = vpack.c.b16 %v58, %v57
  %v73 = vpack.c.b16 %v60, %v59
  %v74 = vpack.c.b16 %v62, %v61
  %v75 = vpack.c.b16 %v64, %v63
  %v76 = vpack.c.b16 %v66, %v65
  %v77 = vpack.c.b16 %v68, %v67
  %v78 = vpack.c.b16 %v70, %v69
  %87 = vmatprep.subr.bf16.mxu0 0
  %88 = vmatpush1.bf16.msra.mxu0 %v71
  %89 = vmatprep.subr.bf16.mxu0 0
  %90 = vmatpush1.bf16.msra.mxu0 %v72
  %91 = vmatprep.subr.bf16.mxu0 0
  %92 = vmatpush1.bf16.msra.mxu0 %v73
  %93 = vmatprep.subr.bf16.mxu0 0
  %94 = vmatpush1.bf16.msra.mxu0 %v74
  %95 = vmatprep.subr.bf16.mxu0 0
  %96 = vmatpush1.bf16.msra.mxu0 %v75
  %97 = vmatprep.subr.bf16.mxu0 0
  %98 = vmatpush1.bf16.msra.mxu0 %v76
  %99 = vmatprep.subr.bf16.mxu0 0
  %100 = vmatpush1.bf16.msra.mxu0 %v77
  %101 = vmatprep.subr.bf16.mxu0 0
  %102 = vmatpush1.bf16.msra.mxu0 %v78
  %103 = vmatprep.subr.bf16.mxu0 0
  %104 = vmatpush1.bf16.msra.mxu0 0
  %105 = vmatprep.subr.bf16.mxu0 0
  %106 = vmatpush1.bf16.msra.mxu0 0
  %107 = vmatprep.subr.bf16.mxu0 0
  %108 = vmatpush1.bf16.msra.mxu0 0
  %109 = vmatprep.subr.bf16.mxu0 0
  %110 = vmatpush1.bf16.msra.mxu0 0
  %111 = vmatprep.subr.bf16.mxu0 0
  %112 = vmatpush1.bf16.msra.mxu0 0
  %113 = vmatprep.subr.bf16.mxu0 0
  %114 = vmatpush1.bf16.msra.mxu0 0
  %115 = vmatprep.subr.bf16.mxu0 0
  %116 = vmatpush1.bf16.msra.mxu0 0
  %117 = vmatprep.subr.bf16.mxu0 0
  %118 = vmatpush1.bf16.msra.mxu0 0
  %119 = vmatprep.mubr.bf16.mxu0 0
  %120 = vmatmul.mubr.bf16.gmra.mrb[0].mxu0 %v37
  %v121 = vpop.f32.mrb[0].mxu0
  %v122 = vadd.f32 0.0, %v121
  %v123 = vpop.f32.mrb[0].mxu0
  %v124 = vpop.f32.mrb[0].mxu0
  %v125 = vadd.f32 0.0, %v124
  %v126 = vpop.f32.mrb[0].mxu0
  %127 = vdwg.mxu0
  %128 = vst [vmem:[%s3] sm:$0xff] %v122
  %129 = vst [vmem:[%s3 + $0x8] sm:$0x7f] %v125
  %v130 = vld [vmem:[%s2] sm:$0x1]
  %131 = vst [vmem:[%s3 + $0xf] sm:$0x1] %v130
  // Predicated region
  $region14: #{input_embedding.1} parent=0 // pred_check
    _
  $region15: #{input_embedding.1} parent=0 // pred_check_branch
    %133 = sbr.rel (0) target = $region17
  $region16: #{input_embedding.1} parent=0 // pred_region
    _
  $region17: #{input_embedding.1} parent=0 // pred_fallthru
    _
  // Predicated region
  $region18: #{input_embedding.1} parent=0 // pred_check
    _
  $region19: #{input_embedding.1} parent=0 // pred_check_branch
    %135 = sbr.rel (0) target = $region21
  $region20: #{input_embedding.1} parent=0 // pred_region
    _
  $region21: #{input_embedding.1} parent=0 // pred_fallthru
    _

</llo_original>
